<compile_context>
chip_gen: v6e
topology: v6e:2x2x1
jax: 0.10.0
libtpu: 0.0.40
codegen_flags: <defaults>
</compile_context>

<pallas_src>
import math

import numpy as np
import jax
import jax.numpy as jnp
from jax.experimental import pallas as pl
from jax.experimental.pallas import tpu as pltpu

# Constants hard-coded inside SystemsOfSprings.f (masses, ground spring/damper).
_INV_MASS = 1.0     # m1..m4 = 1
_K_GROUND = 1.0     # kspringGround
_C_GROUND = 1.0     # cdampGround


# ----------------------------------------------------------------------------
# Fused Pallas kernel: one full Euler step.
#
# state slab S (4, 16):
#   S[:, 0:4]  = x.reshape(4,4)      (rows = agents, cols = [px,py,vx,vy])
#   S[:, 4:8]  = x.reshape(4,4).T    (rows = [px;py;vx;vy] across agents)
#   S[:, 8:10] = u.reshape(4,2)      (per-agent [Fx,Fy])
#   S[:,10:16] = 0 padding
# const slab C (4, 16):
#   C[:, 0:4]  = K   inter-agent spring constants  (k5..k10 placed on pairs)
#   C[:, 4:8]  = L   inter-agent rest lengths      (maxlength5..10)
#   C[:, 8:12] = Cd  inter-agent damping constants (c5..c10, all zero)
#   C[:, 12]   = xt  (Mx @ xbar),  C[:,13] = yt (My @ xbar)
#   C[:, 14]   = h   (Ts)
# output (4, 4): next state, rows = agents, cols = [px,py,vx,vy]
# ----------------------------------------------------------------------------
def _springs_step_kernel(state_ref, const_ref, out_ref):
    S = state_ref[...]            # (4, 16) f32
    C = const_ref[...]            # (4, 16) f32

    # per-agent columns (4,1) and rows (1,4)
    px_c = S[:, 0:1]
    py_c = S[:, 1:2]
    vx_c = S[:, 2:3]
    vy_c = S[:, 3:4]
    px_r = S[0:1, 4:8]
    py_r = S[1:2, 4:8]
    vx_r = S[2:3, 4:8]
    vy_r = S[3:4, 4:8]
    ux_c = S[:, 8:9]
    uy_c = S[:, 9:10]

    K = C[:, 0:4]
    L = C[:, 4:8]
    Cd = C[:, 8:12]
    xt = C[:, 12:13]
    yt = C[:, 13:14]
    h = C[:, 14:15]               # (4,1), same value per row

    # ---- pairwise geometry: d[i,j] = q[i] - q[j] -------------------------
    dx = px_c - px_r              # (4,4)
    dy = py_c - py_r
    dvx = vx_c - vx_r
    dvy = vy_c - vy_r

    r = jnp.sqrt(dx * dx + dy * dy)
    inv_r = jnp.where(r > 0.0, 1.0 / r, 0.0)
    # cos(atan2(dy,dx)) / sin(atan2(dy,dx)) with the atan2(0,0)=0 convention.
    ex = jnp.where(r > 0.0, dx * inv_r, 1.0)
    ey = dy * inv_r

    # ---- inter-agent spring forces (rest length L) -----------------------
    Fk = K * (r - L)                                        # (4,4)
    Fspring_x = -jnp.sum(Fk * ex, axis=1, keepdims=True)    # (4,1)
    Fspring_y = -jnp.sum(Fk * ey, axis=1, keepdims=True)

    # ---- inter-agent dampers: c*|dv|*(dv/|dv|) == c*dv (exact) -----------
    Fdamp_x = -jnp.sum(Cd * dvx, axis=1, keepdims=True)
    Fdamp_y = -jnp.sum(Cd * dvy, axis=1, keepdims=True)

    # ---- ground springs / dampers: k*r*(d/r) == k*d, c*|v|*(v/|v|) == c*v
    dxt = px_c - xt
    dyt = py_c - yt
    Fground_x = -(_K_GROUND * dxt + _C_GROUND * vx_c)
    Fground_y = -(_K_GROUND * dyt + _C_GROUND * vy_c)

    # ---- accelerations (B u folded in; all masses = 1) --------------------
    ax = (Fspring_x + Fdamp_x + Fground_x + ux_c) * _INV_MASS
    ay = (Fspring_y + Fdamp_y + Fground_y + uy_c) * _INV_MASS

    # ---- explicit Euler update --------------------------------------------
    out_ref[:, 0:1] = px_c + vx_c * h
    out_ref[:, 1:2] = py_c + vy_c * h
    out_ref[:, 2:3] = vx_c + ax * h
    out_ref[:, 3:4] = vy_c + ay * h


_springs_step = pl.pallas_call(
    _springs_step_kernel,
    out_shape=jax.ShapeDtypeStruct((4, 4), jnp.float32),
    grid=(1,),
    in_specs=[pl.BlockSpec((4, 16), lambda i: (0, 0)),
              pl.BlockSpec((4, 16), lambda i: (0, 0))],
    out_specs=pl.BlockSpec((4, 4), lambda i: (0, 0)),
    compiler_params=pltpu.CompilerParams(dimension_semantics=("arbitrary",)),
)


def _pack_state(x, u):
    """Layout plumbing: agent-major + component-major views of x, plus u."""
    xs = jnp.asarray(x, jnp.float32).reshape(4, 4)
    us = jnp.asarray(u, jnp.float32).reshape(4, 2)
    pad = jnp.zeros((4, 6), jnp.float32)
    return jnp.concatenate([xs, xs.T, us, pad], axis=1)   # (4, 16)


# ----------------------------------------------------------------------------
# Module wrapper (mirrors the PyTorch SystemsOfSprings interface)
# ----------------------------------------------------------------------------
class SystemsOfSpringsPallas:
    def __init__(self, xbar, Ts):
        self.xbar = jnp.asarray(xbar, jnp.float32)
        self.n_agents = 4
        self.n = 16
        self.m = 8
        self.h = float(Ts)

        ml5, ml6, ml7, ml8 = 4.0, 1.5, 4.0, 1.5
        ml9 = ml10 = math.sqrt(ml7 ** 2 + ml8 ** 2)

        # Spring/damper graph constants (springs 5..10 between agent pairs).
        K = np.zeros((4, 4), np.float32)
        L = np.zeros((4, 4), np.float32)
        for i, j, k_ij, l_ij in [(0, 1, 1.0, ml5), (1, 2, 1.0, ml6),
                                 (2, 3, 1.0, ml7), (3, 0, 1.0, ml8),
                                 (2, 0, 0.0, ml9), (3, 1, 0.0, ml10)]:
            K[i, j] = K[j, i] = k_ij
            L[i, j] = L[j, i] = l_ij
        Cd = np.zeros((4, 4), np.float32)     # cdampInter = 0 -> c5..c10 = 0

        xb = np.asarray(jax.device_get(self.xbar), np.float32).reshape(4, 4)
        const = np.zeros((4, 16), np.float32)
        const[:, 0:4] = K
        const[:, 4:8] = L
        const[:, 8:12] = Cd
        const[:, 12] = xb[:, 0]               # xt = Mx @ xbar
        const[:, 13] = xb[:, 1]               # yt = My @ xbar
        const[:, 14] = self.h
        self._const = jnp.asarray(const)

        self._jit_step = jax.jit(self._step_impl)

    def _step_impl(self, x, u):
        state = _pack_state(x, u)
        out = _springs_step(state, self._const)   # (4,4)
        return out.reshape(16)

    def f(self, t, x, u):
        return self._jit_step(x, u)

    def forward(self, t, x, u, w):
        # w is unused, matching the PyTorch module's forward signature.
        return self.f(t, x, u)


# ----------------------------------------------------------------------------
# Pure-JAX reference: literal translation of SystemsOfSprings.f (torch spec)
# ----------------------------------------------------------------------------
def _reference_forward(x, u, xbar, h):
    m1 = m2 = m3 = m4 = 1.0
    k1 = k2 = k3 = k4 = 1.0
    k5 = k6 = k7 = k8 = 1.0
    k9 = k10 = 0.0
    c1 = c2 = c3 = c4 = 1.0
    c5 = c6 = c7 = c8 = c9 = c10 = 0.0
    ml5, ml6, ml7, ml8 = 4.0, 1.5, 4.0, 1.5
    ml9 = ml10 = float(np.sqrt(ml7 ** 2 + ml8 ** 2))

    ipx = jnp.array([0, 4, 8, 12]); ipy = jnp.array([1, 5, 9, 13])
    ivx = jnp.array([2, 6, 10, 14]); ivy = jnp.array([3, 7, 11, 15])
    px, py, vx, vy = x[ipx], x[ipy], x[ivx], x[ivy]
    xt, yt = xbar[ipx], xbar[ipy]

    dX = px[:, None] - px[None, :]
    dY = py[:, None] - py[None, :]
    dVX = vx[:, None] - vx[None, :]
    dVY = vy[:, None] - vy[None, :]
    dxt = px - xt
    dyt = py - yt
    projx = jnp.cos(jnp.arctan2(dY, dX));  projy = jnp.sin(jnp.arctan2(dY, dX))
    projvx = jnp.cos(jnp.arctan2(dVY, dVX)); projvy = jnp.sin(jnp.arctan2(dVY, dVX))
    projxt = jnp.cos(jnp.arctan2(dyt, dxt)); projyt = jnp.sin(jnp.arctan2(dyt, dxt))
    projvxt = jnp.cos(jnp.arctan2(vy, vx)); projvyt = jnp.sin(jnp.arctan2(vy, vx))

    Fc01 = c1 * jnp.sqrt(vx[0] ** 2 + vy[0] ** 2)
    Fc02 = c2 * jnp.sqrt(vx[1] ** 2 + vy[1] ** 2)
    Fc03 = c3 * jnp.sqrt(vx[2] ** 2 + vy[2] ** 2)
    Fc04 = c4 * jnp.sqrt(vx[3] ** 2 + vy[3] ** 2)
    Fk01 = k1 * jnp.sqrt(dxt[0] ** 2 + dyt[0] ** 2)
    Fk02 = k2 * jnp.sqrt(dxt[1] ** 2 + dyt[1] ** 2)
    Fk03 = k3 * jnp.sqrt(dxt[2] ** 2 + dyt[2] ** 2)
    Fk04 = k4 * jnp.sqrt(dxt[3] ** 2 + dyt[3] ** 2)
    Fk5 = k5 * (jnp.sqrt(dX[0, 1] ** 2 + dY[0, 1] ** 2) - ml5)
    Fk6 = k6 * (jnp.sqrt(dX[1, 2] ** 2 + dY[1, 2] ** 2) - ml6)
    Fk7 = k7 * (jnp.sqrt(dX[2, 3] ** 2 + dY[2, 3] ** 2) - ml7)
    Fk8 = k8 * (jnp.sqrt(dX[3, 0] ** 2 + dY[3, 0] ** 2) - ml8)
    Fk9 = k9 * (jnp.sqrt(dX[2, 0] ** 2 + dY[2, 0] ** 2) - ml9)
    Fk10 = k10 * (jnp.sqrt(dX[3, 1] ** 2 + dY[3, 1] ** 2) - ml10)
    Fc5 = c5 * jnp.sqrt(dVX[0, 1] ** 2 + dVY[0, 1] ** 2)
    Fc6 = c6 * jnp.sqrt(dVX[1, 2] ** 2 + dVY[1, 2] ** 2)
    Fc7 = c7 * jnp.sqrt(dVX[2, 3] ** 2 + dVY[2, 3] ** 2)
    Fc8 = c8 * jnp.sqrt(dVX[3, 0] ** 2 + dVY[3, 0] ** 2)
    Fc9 = c9 * jnp.sqrt(dVX[2, 0] ** 2 + dVY[2, 0] ** 2)
    Fc10 = c10 * jnp.sqrt(dVX[3, 1] ** 2 + dVY[3, 1] ** 2)

    Fs1x = -(Fk5 * projx[0, 1] + Fk8 * projx[0, 3] + Fk9 * projx[0, 2])
    Fd1x = -(Fc5 * projvx[0, 1] + Fc8 * projvx[0, 3] + Fc9 * projvx[0, 2])
    Fg1x = -Fk01 * projxt[0] - Fc01 * projvxt[0]
    Fs1y = -(Fk5 * projy[0, 1] + Fk8 * projy[0, 3] + Fk9 * projy[0, 2])
    Fd1y = -(Fc5 * projvy[0, 1] + Fc8 * projvy[0, 3] + Fc9 * projvy[0, 2])
    Fg1y = -Fk01 * projyt[0] - Fc01 * projvyt[0]
    Fs2x = -(Fk5 * projx[1, 0] + Fk6 * projx[1, 2] + Fk10 * projx[1, 3])
    Fd2x = -(Fc5 * projvx[1, 0] + Fc6 * projvx[1, 2] + Fc10 * projvx[1, 3])
    Fg2x = -Fk02 * projxt[1] - Fc02 * projvxt[1]
    Fs2y = -(Fk5 * projy[1, 0] + Fk6 * projy[1, 2] + Fk10 * projy[1, 3])
    Fd2y = -(Fc5 * projvy[1, 0] + Fc6 * projvy[1, 2] + Fc10 * projvy[1, 3])
    Fg2y = -Fk02 * projyt[1] - Fc02 * projvyt[1]
    Fs3x = -(Fk6 * projx[2, 1] + Fk7 * projx[2, 3] + Fk9 * projx[2, 0])
    Fd3x = -(Fc6 * projvx[2, 1] + Fc7 * projvx[2, 3] + Fc9 * projvx[2, 0])
    Fg3x = -Fk03 * projxt[2] - Fc03 * projvxt[2]
    Fs3y = -(Fk6 * projy[2, 1] + Fk7 * projy[2, 3] + Fk9 * projy[2, 0])
    Fd3y = -(Fc6 * projvy[2, 1] + Fc7 * projvy[2, 3] + Fc9 * projvy[2, 0])
    Fg3y = -Fk03 * projyt[2] - Fc03 * projvyt[2]
    Fs4x = -(Fk7 * projx[3, 2] + Fk8 * projx[3, 0] + Fk10 * projx[3, 1])
    Fd4x = -(Fc7 * projvx[3, 2] + Fc8 * projvx[3, 0] + Fc10 * projvx[3, 1])
    Fg4x = -Fk04 * projxt[3] - Fc04 * projvxt[3]
    Fs4y = -(Fk7 * projy[3, 2] + Fk8 * projy[3, 0] + Fk10 * projy[3, 1])
    Fd4y = -(Fc7 * projvy[3, 2] + Fc8 * projvy[3, 0] + Fc10 * projvy[3, 1])
    Fg4y = -Fk04 * projyt[3] - Fc04 * projvyt[3]

    z = jnp.float32(0.0)
    A1x = jnp.stack([
        z, z, (Fs1x + Fd1x + Fg1x) / m1, (Fs1y + Fd1y + Fg1y) / m1,
        z, z, (Fs2x + Fd2x + Fg2x) / m2, (Fs2y + Fd2y + Fg2y) / m2,
        z, z, (Fs3x + Fd3x + Fg3x) / m3, (Fs3y + Fd3y + Fg3y) / m3,
        z, z, (Fs4x + Fd4x + Fg4x) / m4, (Fs4y + Fd4y + Fg4y) / m4])
    A2x = jnp.stack([vx[0], vy[0], z, z, vx[1], vy[1], z, z,
                     vx[2], vy[2], z, z, vx[3], vy[3], z, z])
    Bu = jnp.stack([z, z, u[0] / m1, u[1] / m1, z, z, u[2] / m2, u[3] / m2,
                    z, z, u[4] / m3, u[5] / m3, z, z, u[6] / m4, u[7] / m4])
    return x + (A1x + A2x + Bu) * h


# ----------------------------------------------------------------------------
# Main
# ----------------------------------------------------------------------------
if __name__ == "__main__":
    key = jax.random.PRNGKey(0)
    kx, ku, kb, kw = jax.random.split(key, 4)

    Ts = 0.05
    xbar = jax.random.normal(kb, (16,), jnp.float32) * 2.0   # target equilibrium
    x = jax.random.normal(kx, (16,), jnp.float32)            # current state
    u = jax.random.normal(ku, (8,), jnp.float32)             # control input
    w = jax.random.normal(kw, (16,), jnp.float32)            # unused by forward()

    model = SystemsOfSpringsPallas(xbar, Ts)

    t = 0
    x1 = model.forward(t, x, u, w)
    x1 = jax.block_until_ready(x1)

    # Correctness vs literal translation of the PyTorch spec.
    ref = jax.block_until_ready(_reference_forward(x, u, xbar, Ts))

    assert x1.shape == (16,)
    assert x1.dtype == jnp.float32
    assert bool(jnp.all(jnp.isfinite(x1)))
    max_err = float(jnp.max(jnp.abs(x1 - ref)))
    assert max_err < 1e-3, f"Pallas kernel mismatch vs reference: {max_err}"

    print("KERNEL_OK")
</pallas_src>

<mosaic_0001>
module attributes {stable_mosaic.version = 11 : i64} {
  func.func @_springs_step_kernel(%arg0: i32, %arg1: memref<4x16xf32, #tpu.memory_space<vmem>>, %arg2: memref<4x16xf32, #tpu.memory_space<vmem>>, %arg3: memref<4x4xf32, #tpu.memory_space<vmem>>) attributes {dimension_semantics = [#tpu.dimension_semantics<arbitrary>], iteration_bounds = array<i64: 1>, scalar_prefetch = 0 : i64, scratch_operands = 0 : i64, tpu.core_type = #tpu.core_type<tc>, window_params = [{pipeline_mode = #tpu.pipeline_mode<synchronous>, transform_indices = @transform_0, window_bounds = array<i64: 4, 16>}, {pipeline_mode = #tpu.pipeline_mode<synchronous>, transform_indices = @transform_1, window_bounds = array<i64: 4, 16>}, {pipeline_mode = #tpu.pipeline_mode<synchronous>, transform_indices = @transform_2, window_bounds = array<i64: 4, 4>}]} {
    %c0 = arith.constant 0 : index
    %c0_0 = arith.constant 0 : index
    %0 = vector.load %arg1[%c0, %c0_0] : memref<4x16xf32, #tpu.memory_space<vmem>>, vector<4x16xf32>
    %c0_1 = arith.constant 0 : index
    %c0_2 = arith.constant 0 : index
    %1 = vector.load %arg2[%c0_1, %c0_2] : memref<4x16xf32, #tpu.memory_space<vmem>>, vector<4x16xf32>
    %2 = vector.extract_strided_slice %0 {offsets = [0, 0], sizes = [4, 1], strides = [1, 1]} : vector<4x16xf32> to vector<4x1xf32>
    %3 = vector.extract_strided_slice %0 {offsets = [0, 1], sizes = [4, 1], strides = [1, 1]} : vector<4x16xf32> to vector<4x1xf32>
    %4 = vector.extract_strided_slice %0 {offsets = [0, 2], sizes = [4, 1], strides = [1, 1]} : vector<4x16xf32> to vector<4x1xf32>
    %5 = vector.extract_strided_slice %0 {offsets = [0, 3], sizes = [4, 1], strides = [1, 1]} : vector<4x16xf32> to vector<4x1xf32>
    %6 = vector.extract_strided_slice %0 {offsets = [0, 4], sizes = [1, 4], strides = [1, 1]} : vector<4x16xf32> to vector<1x4xf32>
    %7 = vector.extract_strided_slice %0 {offsets = [1, 4], sizes = [1, 4], strides = [1, 1]} : vector<4x16xf32> to vector<1x4xf32>
    %8 = vector.extract_strided_slice %0 {offsets = [2, 4], sizes = [1, 4], strides = [1, 1]} : vector<4x16xf32> to vector<1x4xf32>
    %9 = vector.extract_strided_slice %0 {offsets = [3, 4], sizes = [1, 4], strides = [1, 1]} : vector<4x16xf32> to vector<1x4xf32>
    %10 = vector.extract_strided_slice %0 {offsets = [0, 8], sizes = [4, 1], strides = [1, 1]} : vector<4x16xf32> to vector<4x1xf32>
    %11 = vector.extract_strided_slice %0 {offsets = [0, 9], sizes = [4, 1], strides = [1, 1]} : vector<4x16xf32> to vector<4x1xf32>
    %12 = vector.extract_strided_slice %1 {offsets = [0, 0], sizes = [4, 4], strides = [1, 1]} : vector<4x16xf32> to vector<4x4xf32>
    %13 = vector.extract_strided_slice %1 {offsets = [0, 4], sizes = [4, 4], strides = [1, 1]} : vector<4x16xf32> to vector<4x4xf32>
    %14 = vector.extract_strided_slice %1 {offsets = [0, 8], sizes = [4, 4], strides = [1, 1]} : vector<4x16xf32> to vector<4x4xf32>
    %15 = vector.extract_strided_slice %1 {offsets = [0, 12], sizes = [4, 1], strides = [1, 1]} : vector<4x16xf32> to vector<4x1xf32>
    %16 = vector.extract_strided_slice %1 {offsets = [0, 13], sizes = [4, 1], strides = [1, 1]} : vector<4x16xf32> to vector<4x1xf32>
    %17 = vector.extract_strided_slice %1 {offsets = [0, 14], sizes = [4, 1], strides = [1, 1]} : vector<4x16xf32> to vector<4x1xf32>
    %18 = vector.broadcast %2 : vector<4x1xf32> to vector<4x4xf32>
    %19 = vector.broadcast %6 : vector<1x4xf32> to vector<4x4xf32>
    %20 = arith.subf %18, %19 : vector<4x4xf32>
    %21 = vector.broadcast %3 : vector<4x1xf32> to vector<4x4xf32>
    %22 = vector.broadcast %7 : vector<1x4xf32> to vector<4x4xf32>
    %23 = arith.subf %21, %22 : vector<4x4xf32>
    %24 = vector.broadcast %4 : vector<4x1xf32> to vector<4x4xf32>
    %25 = vector.broadcast %8 : vector<1x4xf32> to vector<4x4xf32>
    %26 = arith.subf %24, %25 : vector<4x4xf32>
    %27 = vector.broadcast %5 : vector<4x1xf32> to vector<4x4xf32>
    %28 = vector.broadcast %9 : vector<1x4xf32> to vector<4x4xf32>
    %29 = arith.subf %27, %28 : vector<4x4xf32>
    %30 = arith.mulf %20, %20 : vector<4x4xf32>
    %31 = arith.mulf %23, %23 : vector<4x4xf32>
    %32 = arith.addf %30, %31 : vector<4x4xf32>
    %33 = math.sqrt %32 : vector<4x4xf32>
    %cst = arith.constant 0.000000e+00 : f32
    %34 = vector.broadcast %cst : f32 to vector<4x4xf32>
    %35 = arith.cmpf ogt, %33, %34 : vector<4x4xf32>
    %cst_3 = arith.constant 1.000000e+00 : f32
    %36 = vector.broadcast %cst_3 : f32 to vector<4x4xf32>
    %37 = arith.divf %36, %33 : vector<4x4xf32>
    %cst_4 = arith.constant 0.000000e+00 : f32
    %38 = vector.broadcast %cst_4 : f32 to vector<4x4xf32>
    %39 = arith.select %35, %37, %38 : vector<4x4xi1>, vector<4x4xf32>
    %cst_5 = arith.constant 0.000000e+00 : f32
    %40 = vector.broadcast %cst_5 : f32 to vector<4x4xf32>
    %41 = arith.cmpf ogt, %33, %40 : vector<4x4xf32>
    %42 = arith.mulf %20, %39 : vector<4x4xf32>
    %cst_6 = arith.constant 1.000000e+00 : f32
    %43 = vector.broadcast %cst_6 : f32 to vector<4x4xf32>
    %44 = arith.select %41, %42, %43 : vector<4x4xi1>, vector<4x4xf32>
    %45 = arith.mulf %23, %39 : vector<4x4xf32>
    %46 = arith.subf %33, %13 : vector<4x4xf32>
    %47 = arith.mulf %12, %46 : vector<4x4xf32>
    %48 = arith.mulf %47, %44 : vector<4x4xf32>
    %cst_7 = arith.constant dense<0.000000e+00> : vector<4xf32>
    %49 = vector.multi_reduction <add>, %48, %cst_7 [1] : vector<4x4xf32> to vector<4xf32>
    %50 = vector.shape_cast %49 : vector<4xf32> to vector<4x1xf32>
    %cst_8 = arith.constant 0.000000e+00 : f32
    %51 = vector.broadcast %cst_8 : f32 to vector<4x1xf32>
    %52 = arith.subf %51, %50 : vector<4x1xf32>
    %53 = arith.mulf %47, %45 : vector<4x4xf32>
    %cst_9 = arith.constant dense<0.000000e+00> : vector<4xf32>
    %54 = vector.multi_reduction <add>, %53, %cst_9 [1] : vector<4x4xf32> to vector<4xf32>
    %55 = vector.shape_cast %54 : vector<4xf32> to vector<4x1xf32>
    %cst_10 = arith.constant 0.000000e+00 : f32
    %56 = vector.broadcast %cst_10 : f32 to vector<4x1xf32>
    %57 = arith.subf %56, %55 : vector<4x1xf32>
    %58 = arith.mulf %14, %26 : vector<4x4xf32>
    %cst_11 = arith.constant dense<0.000000e+00> : vector<4xf32>
    %59 = vector.multi_reduction <add>, %58, %cst_11 [1] : vector<4x4xf32> to vector<4xf32>
    %60 = vector.shape_cast %59 : vector<4xf32> to vector<4x1xf32>
    %cst_12 = arith.constant 0.000000e+00 : f32
    %61 = vector.broadcast %cst_12 : f32 to vector<4x1xf32>
    %62 = arith.subf %61, %60 : vector<4x1xf32>
    %63 = arith.mulf %14, %29 : vector<4x4xf32>
    %cst_13 = arith.constant dense<0.000000e+00> : vector<4xf32>
    %64 = vector.multi_reduction <add>, %63, %cst_13 [1] : vector<4x4xf32> to vector<4xf32>
    %65 = vector.shape_cast %64 : vector<4xf32> to vector<4x1xf32>
    %cst_14 = arith.constant 0.000000e+00 : f32
    %66 = vector.broadcast %cst_14 : f32 to vector<4x1xf32>
    %67 = arith.subf %66, %65 : vector<4x1xf32>
    %68 = arith.subf %2, %15 : vector<4x1xf32>
    %69 = arith.subf %3, %16 : vector<4x1xf32>
    %cst_15 = arith.constant 1.000000e+00 : f32
    %70 = vector.broadcast %cst_15 : f32 to vector<4x1xf32>
    %71 = arith.mulf %70, %68 : vector<4x1xf32>
    %cst_16 = arith.constant 1.000000e+00 : f32
    %72 = vector.broadcast %cst_16 : f32 to vector<4x1xf32>
    %73 = arith.mulf %72, %4 : vector<4x1xf32>
    %74 = arith.addf %71, %73 : vector<4x1xf32>
    %cst_17 = arith.constant 0.000000e+00 : f32
    %75 = vector.broadcast %cst_17 : f32 to vector<4x1xf32>
    %76 = arith.subf %75, %74 : vector<4x1xf32>
    %cst_18 = arith.constant 1.000000e+00 : f32
    %77 = vector.broadcast %cst_18 : f32 to vector<4x1xf32>
    %78 = arith.mulf %77, %69 : vector<4x1xf32>
    %cst_19 = arith.constant 1.000000e+00 : f32
    %79 = vector.broadcast %cst_19 : f32 to vector<4x1xf32>
    %80 = arith.mulf %79, %5 : vector<4x1xf32>
    %81 = arith.addf %78, %80 : vector<4x1xf32>
    %cst_20 = arith.constant 0.000000e+00 : f32
    %82 = vector.broadcast %cst_20 : f32 to vector<4x1xf32>
    %83 = arith.subf %82, %81 : vector<4x1xf32>
    %84 = arith.addf %52, %62 : vector<4x1xf32>
    %85 = arith.addf %84, %76 : vector<4x1xf32>
    %86 = arith.addf %85, %10 : vector<4x1xf32>
    %cst_21 = arith.constant 1.000000e+00 : f32
    %87 = vector.broadcast %cst_21 : f32 to vector<4x1xf32>
    %88 = arith.mulf %86, %87 : vector<4x1xf32>
    %89 = arith.addf %57, %67 : vector<4x1xf32>
    %90 = arith.addf %89, %83 : vector<4x1xf32>
    %91 = arith.addf %90, %11 : vector<4x1xf32>
    %cst_22 = arith.constant 1.000000e+00 : f32
    %92 = vector.broadcast %cst_22 : f32 to vector<4x1xf32>
    %93 = arith.mulf %91, %92 : vector<4x1xf32>
    %94 = arith.mulf %4, %17 : vector<4x1xf32>
    %95 = arith.addf %2, %94 : vector<4x1xf32>
    %c0_23 = arith.constant 0 : index
    %c0_24 = arith.constant 0 : index
    %96 = vector.load %arg3[%c0_23, %c0_24] : memref<4x4xf32, #tpu.memory_space<vmem>>, vector<4x1xf32>
    tpu.vector_store %arg3[%c0_23, %c0_24], %95 {strides = array<i32>} : memref<4x4xf32, #tpu.memory_space<vmem>>, vector<4x1xf32>,
    %97 = arith.mulf %5, %17 : vector<4x1xf32>
    %98 = arith.addf %3, %97 : vector<4x1xf32>
    %c0_25 = arith.constant 0 : index
    %c1 = arith.constant 1 : index
    %99 = vector.load %arg3[%c0_25, %c1] : memref<4x4xf32, #tpu.memory_space<vmem>>, vector<4x1xf32>
    tpu.vector_store %arg3[%c0_25, %c1], %98 {strides = array<i32>} : memref<4x4xf32, #tpu.memory_space<vmem>>, vector<4x1xf32>,
    %100 = arith.mulf %88, %17 : vector<4x1xf32>
    %101 = arith.addf %4, %100 : vector<4x1xf32>
    %c0_26 = arith.constant 0 : index
    %c2 = arith.constant 2 : index
    %102 = vector.load %arg3[%c0_26, %c2] : memref<4x4xf32, #tpu.memory_space<vmem>>, vector<4x1xf32>
    tpu.vector_store %arg3[%c0_26, %c2], %101 {strides = array<i32>} : memref<4x4xf32, #tpu.memory_space<vmem>>, vector<4x1xf32>,
    %103 = arith.mulf %93, %17 : vector<4x1xf32>
    %104 = arith.addf %5, %103 : vector<4x1xf32>
    %c0_27 = arith.constant 0 : index
    %c3 = arith.constant 3 : index
    %105 = vector.load %arg3[%c0_27, %c3] : memref<4x4xf32, #tpu.memory_space<vmem>>, vector<4x1xf32>
    tpu.vector_store %arg3[%c0_27, %c3], %104 {strides = array<i32>} : memref<4x4xf32, #tpu.memory_space<vmem>>, vector<4x1xf32>,
    return
  }
  func.func @transform_0(%arg0: i32) -> (i32, i32) {
    %c0_i32 = arith.constant 0 : i32
    %c0_i32_0 = arith.constant 0 : i32
    %c0_i32_1 = arith.constant 0 : i32
    return %c0_i32, %c0_i32_0 : i32, i32
  }
  func.func @transform_1(%arg0: i32) -> (i32, i32) {
    %c0_i32 = arith.constant 0 : i32
    %c0_i32_0 = arith.constant 0 : i32
    %c0_i32_1 = arith.constant 0 : i32
    return %c0_i32, %c0_i32_0 : i32, i32
  }
  func.func @transform_2(%arg0: i32) -> (i32, i32) {
    %c0_i32 = arith.constant 0 : i32
    %c0_i32_0 = arith.constant 0 : i32
    %c0_i32_1 = arith.constant 0 : i32
    return %c0_i32, %c0_i32_0 : i32, i32
  }
}

</mosaic_0001>

<llo_original>
// kernel: _step_impl.1
$region0: #{_step_impl.1}
  #allocation0 [shape = 'u32[]', space=smem, size = 0x4, offset = 0x4, fixed_abs, tag = 'smem constant byte address 0x4 - core index']
  #allocation1 [shape = 'u32[144,128]{1,0:T(1,128)}', space=vmem, size = 0x12000, scoped, tag = 'internal scratch']
  %s0 = inlined_call_operand.vmem [shape: f32[4,16], index: 0, kind: input, shape index: {}]
  %s1 = inlined_call_operand.vmem [shape: f32[4,16], index: 1, kind: input, shape index: {}]
  %s2 = inlined_call_operand.vmem [shape: f32[4,4], index: 2, kind: output, shape index: {}]
  %s3 = sld [smem:[#allocation0]]
  $region18: #{_step_impl.1} parent=0
    _
  %s5 = ssub.s32 1, %s3
  %s6 = scalar_select 0, %s5, %s3
  // Predicated region
  $region2: #{_step_impl.1} parent=0 // pred_check
    _
  $region3: #{_step_impl.1} parent=0 // pred_check_branch
    %8 = sbr.rel (0) target = $region5
  $region4: #{_step_impl.1} parent=0 // pred_region
    _
  $region5: #{_step_impl.1} parent=0 // pred_fallthru
    _
  // Predicated region
  $region6: #{_step_impl.1} parent=0 // pred_check
    _
  $region7: #{_step_impl.1} parent=0 // pred_check_branch
    %10 = sbr.rel (0) target = $region9
  $region8: #{_step_impl.1} parent=0 // pred_region
    _
  $region9: #{_step_impl.1} parent=0 // pred_fallthru
    _
  %v11 = vld [vmem:[%s0] sm:$0xf]
  %v12 = vld [vmem:[%s1] sm:$0xf]
  %14 = vset.pattern.permute.xlu0 0
  %15 = vperm.xlu0 %14, %v11
  %v16 = vpop.permute.xlu0 %15
  %v18 = vlaneseq
  %v19 = vshrl.u32 %v18, 7
  %v20 = vsub.s32 0, %v19
  %v21 = vrot.slane %v11, %v20
  %v22 = vsub.f32 %v16, %v21
  %23 = vset.pattern.permute.xlu0 1
  %24 = vperm.xlu0 %23, %v11
  %v25 = vpop.permute.xlu0 %24
  %v27 = vlaneseq
  %v28 = vshrl.u32 %v27, 7
  %v29 = vsub.s32 1, %v28
  %v30 = vrot.slane %v11, %v29
  %v31 = vsub.f32 %v25, %v30
  %32 = vset.pattern.permute.xlu0 2
  %33 = vperm.xlu0 %32, %v11
  %v34 = vpop.permute.xlu0 %33
  %v36 = vlaneseq
  %v37 = vshrl.u32 %v36, 7
  %v38 = vsub.s32 2, %v37
  %v39 = vrot.slane %v11, %v38
  %v40 = vsub.f32 %v34, %v39
  %41 = vset.pattern.permute.xlu0 3
  %42 = vperm.xlu0 %41, %v11
  %v43 = vpop.permute.xlu0 %42
  %v45 = vlaneseq
  %v46 = vshrl.u32 %v45, 7
  %v47 = vsub.s32 3, %v46
  %v48 = vrot.slane %v11, %v47
  %v49 = vsub.f32 %v43, %v48
  %v50 = vmul.f32 %v22, %v22
  %v51 = vmul.f32 %v31, %v31
  %v52 = vadd.f32 %v50, %v51
  %v53 = vrsqrt.pop %v52
  %v54 = vmul.f32 %v52, %v53
  %vm55 = vcmp.eq.f32.partialorder %v52, inf
  %v56 = vsel %vm55, %v52, %v54
  %vm57 = vcmp.eq.f32.partialorder %v52, 0.0
  %v58 = vand.u32 %v52, 2147483648
  %v59 = vsel %vm57, %v58, %v56
  %vm60 = vcmp.gt.f32.partialorder %v59, 0.0
  %v61 = vrcp.pop %v59
  %v62 = vmul.f32 1.0, %v61
  %v63 = vsel %vm60, %v62, 0.0
  %v64 = vmul.f32 %v22, %v63
  %v65 = vsel %vm60, %v64, 1.0
  %v66 = vmul.f32 %v31, %v63
  %v67 = vsub.f32 %v59, %v12
  %69 = vrot.lane.b32.xlu0 %v67, 124
  %v70 = vpop.permute.xlu0 %69
  %v72 = vmul.f32 %v12, %v70
  %74 = vrot.lane.b32.xlu0 %v65, 124
  %v75 = vpop.permute.xlu0 %74
  %v77 = vmul.f32 %v72, %v75
  %vm78 = vcmask 27648
  %v79 = vsel %vm78, %v77, 0.0
  %80 = vadd.xlane.f32.xlu0 %v79
  %v81 = vpop.xlane.xlu0 %80
  %v82 = vsub.f32 0.0, %v81
  %84 = vrot.lane.b32.xlu0 %v66, 124
  %v85 = vpop.permute.xlu0 %84
  %v87 = vmul.f32 %v72, %v85
  %v88 = vsel %vm78, %v87, 0.0
  %89 = vadd.xlane.f32.xlu0 %v88
  %v90 = vpop.xlane.xlu0 %89
  %v91 = vsub.f32 0.0, %v90
  %93 = vrot.lane.b32.xlu0 %v40, 4
  %v94 = vpop.permute.xlu0 %93
  %v96 = vmul.f32 %v12, %v94
  %98 = vrot.lane.b32.xlu0 %v96, 120
  %v99 = vpop.permute.xlu0 %98
  %v101 = vsel %vm78, %v99, 0.0
  %102 = vadd.xlane.f32.xlu0 %v101
  %v103 = vpop.xlane.xlu0 %102
  %v104 = vsub.f32 0.0, %v103
  %106 = vrot.lane.b32.xlu0 %v49, 4
  %v107 = vpop.permute.xlu0 %106
  %v109 = vmul.f32 %v12, %v107
  %111 = vrot.lane.b32.xlu0 %v109, 120
  %v112 = vpop.permute.xlu0 %111
  %v114 = vsel %vm78, %v112, 0.0
  %115 = vadd.xlane.f32.xlu0 %v114
  %v116 = vpop.xlane.xlu0 %115
  %v117 = vsub.f32 0.0, %v116
  %119 = vrot.lane.b32.xlu0 %v12, 116
  %v120 = vpop.permute.xlu0 %119
  %v122 = vsub.f32 %v11, %v120
  %123 = vrot.lane.b32.xlu0 %v11, 126
  %v124 = vpop.permute.xlu0 %123
  %v126 = vadd.f32 %v122, %v124
  %v127 = vsub.f32 0.0, %v126
  %v128 = vadd.f32 %v82, %v104
  %v129 = vadd.f32 %v128, %v127
  %130 = vrot.lane.b32.xlu0 %v11, 120
  %v131 = vpop.permute.xlu0 %130
  %v133 = vadd.f32 %v129, %v131
  %v134 = vadd.f32 %v91, %v117
  %v135 = vadd.f32 %v134, %v127
  %v136 = vadd.f32 %v135, %v131
  %v137 = vmul.f32 %v11, %v120
  %139 = vrot.lane.b32.xlu0 %v137, 126
  %v140 = vpop.permute.xlu0 %139
  %v142 = vadd.f32 %v11, %v140
  %vm143 = vcmask 3072
  %144 = vst.msk [vmem:[%s2] sm:$0xf] %vm143, %v142
  %145 = vrot.lane.b32.xlu0 %v12, 117
  %v146 = vpop.permute.xlu0 %145
  %v148 = vmul.f32 %v11, %v146
  %150 = vrot.lane.b32.xlu0 %v148, 126
  %v151 = vpop.permute.xlu0 %150
  %v153 = vadd.f32 %v11, %v151
  %vm154 = vcmask 11272
  %155 = vst.msk [vmem:[%s2] sm:$0xf] %vm154, %v153
  %156 = vrot.lane.b32.xlu0 %v12, 114
  %v157 = vpop.permute.xlu0 %156
  %v159 = vmul.f32 %v133, %v157
  %161 = vrot.lane.b32.xlu0 %v159, 2
  %v162 = vpop.permute.xlu0 %161
  %v164 = vadd.f32 %v11, %v162
  %vm165 = vcmask 19472
  %166 = vst.msk [vmem:[%s2] sm:$0xf] %vm165, %v164
  %167 = vrot.lane.b32.xlu0 %v12, 115
  %v168 = vpop.permute.xlu0 %167
  %v170 = vmul.f32 %v136, %v168
  %172 = vrot.lane.b32.xlu0 %v170, 2
  %v173 = vpop.permute.xlu0 %172
  %v175 = vadd.f32 %v11, %v173
  %vm176 = vcmask 27672
  %177 = vst.msk [vmem:[%s2] sm:$0xf] %vm176, %v175
  // Predicated region
  $region10: #{_step_impl.1} parent=0 // pred_check
    _
  $region11: #{_step_impl.1} parent=0 // pred_check_branch
    %179 = sbr.rel (0) target = $region13
  $region12: #{_step_impl.1} parent=0 // pred_region
    _
  $region13: #{_step_impl.1} parent=0 // pred_fallthru
    _
  // Predicated region
  $region14: #{_step_impl.1} parent=0 // pred_check
    _
  $region15: #{_step_impl.1} parent=0 // pred_check_branch
    %181 = sbr.rel (0) target = $region17
  $region16: #{_step_impl.1} parent=0 // pred_region
    _
  $region17: #{_step_impl.1} parent=0 // pred_fallthru
    _

</llo_original>
